<compile_context>
chip_gen: v7x
topology: tpu7x:2x2x1
jax: 0.10.0
libtpu: 0.0.40
codegen_flags: <defaults>
</compile_context>

<pallas_src>
import functools
import numpy as np
import jax
import jax.numpy as jnp
from jax.experimental import pallas as pl
from jax.experimental.pallas import tpu as pltpu


# ----------------------------------------------------------------------------
# Tree helpers (numpy, trace-time only) — mirror the helpers used in __init__.
# ----------------------------------------------------------------------------
def reachability_from_adjacency_matrix(adj: np.ndarray) -> np.ndarray:
    """reach[i, j] = 1 iff j is reachable from i (reflexive-transitive closure)."""
    n = adj.shape[0]
    reach = (np.eye(n, dtype=np.int64) + adj.astype(np.int64)) > 0
    for k in range(n):
        reach = reach | (reach[:, k : k + 1] & reach[k : k + 1, :])
    return reach.astype(np.int64)


def bitpack_tree(adj: np.ndarray):
    """bitmask_classes[i] = bits of {i} ∪ ancestors(i); bitmask_groups identical (single-word
    packing).  Built for parity with the torch module; the kernel uses the equivalent
    reachability formulation (see header comment)."""
    n = adj.shape[0]
    reach = reachability_from_adjacency_matrix(adj)  # reach[a, d]: a ancestor-or-self of d
    bm = np.zeros(n, dtype=np.int64)
    for d in range(n):
        for a in range(n):
            if reach[a, d]:
                bm[d] |= 1 << a
    return bm.copy(), bm.copy()


# TODO(synk): sibling_from_adjacency_matrix / the sink-dice branch uses data-dependent Python
# control flow (`continue` on empty sibling masks); with sink_mask == zeros the torch forward
# yields sink_dice == 0 exactly, which is what we reproduce here.


# ----------------------------------------------------------------------------
# Fused kernel: 1x1 conv + softmax + leaf-argmax + loss / confusion statistics.
#
# Per-tile layout: x (K, Tp), everything per-class is (C, Tp) — pixels on lanes.
# Scratch accumulator acc_ref (C, 8), columns:
#   0 inter, 1 prob_sum, 2 tgt_sum, 3 tp, 4 pred_sum, 5 ce_sum (replicated),
#   6 valid_count (replicated), 7 unused.
# ----------------------------------------------------------------------------
def fused_forward_kernel(x_ref, y_ref, w_ref, b_ref, leaf_ref, reach_ref,
                         pred_ref, stats_ref, acc_ref, *, eps):
    t = pl.program_id(1)

    @pl.when(t == 0)
    def _init():
        acc_ref[...] = jnp.zeros_like(acc_ref)

    x = x_ref[0]                                              # (K, Tp)
    C = w_ref.shape[0]
    Tp = x.shape[1]

    # 1x1 conv: per-pixel logits with pixels on the lane axis.
    logits = jnp.dot(w_ref[...], x, preferred_element_type=jnp.float32) + b_ref[...]   # (C, Tp)

    # Softmax over the (sublane) class axis; CE pieces straight from log-softmax.
    m = jnp.max(logits, axis=0, keepdims=True)                # (1, Tp)
    e = jnp.exp(logits - m)                                   # (C, Tp)   EUP
    s = jnp.sum(e, axis=0, keepdims=True)                     # (1, Tp)
    probs = e * pl.reciprocal(s, approx=True)                 # (C, Tp)   EUP recip
    # log(clip(p, eps, 1-eps)) == clip(log p, log eps, log(1-eps))  (log is monotone),
    # so this matches the torch clipped-log CE exactly while staying in log-space.
    logp = jnp.clip(logits - m - jnp.log(s),
                    float(np.log(eps)), float(np.log1p(-eps)))  # (C, Tp)

    # _argmax_leafs: argmax restricted to leaf classes, reported as global class index
    # (first / smallest index wins on ties).  Argmax of logits == argmax of probs.
    cls = jax.lax.broadcasted_iota(jnp.int32, (C, Tp), 0)     # class id per sublane row
    leaf_col = leaf_ref[...] > 0.0                            # (C, 1)
    masked = jnp.where(leaf_col, logits, -jnp.inf)
    mx = jnp.max(masked, axis=0, keepdims=True)               # (1, Tp)
    pred_f = jnp.min(jnp.where(masked == mx, cls.astype(jnp.float32), float(C)),
                     axis=0, keepdims=True)                   # (1, Tp)
    pred = pred_f.astype(jnp.int32)
    pred_ref[0] = pred                                        # lane-dense store

    # Labels / validity (255 == ignore).
    y = y_ref[0]                                              # (1, Tp) int32
    valid = y != 255
    vm = valid.astype(jnp.float32)                            # (1, Tp)
    y_safe = jnp.where(valid, y, 0)

    # Hierarchical multi-hot target / prediction via reachability @ one-hot
    # (== the torch bitmask test "(x & group) == class", see header).
    onehot_y = (cls == y_safe).astype(jnp.float32)            # (C, Tp)
    onehot_p = (cls == pred).astype(jnp.float32)              # (C, Tp)
    reach = reach_ref[...]                                    # (C, C): reach[c, j] = c anc-or-self of j
    tgt = jnp.dot(reach, onehot_y, preferred_element_type=jnp.float32)   # (C, Tp)
    prd = jnp.dot(reach, onehot_p, preferred_element_type=jnp.float32)   # (C, Tp)

    vt = vm * tgt                                             # valid-masked target
    inter = jnp.sum(vt * probs, axis=1, keepdims=True)        # (C, 1) Dice numerator
    psum  = jnp.sum(vm * probs, axis=1, keepdims=True)        # (C, 1)
    tsum  = jnp.sum(vt, axis=1, keepdims=True)                # (C, 1)
    tp    = jnp.sum(vt * prd, axis=1, keepdims=True)          # (C, 1) fp/fn derived in wrapper
    prsum = jnp.sum(vm * prd, axis=1, keepdims=True)          # (C, 1)
    ce    = jnp.sum(vt * (-logp))                             # scalar: CE over valid pixels/classes
    cnt   = jnp.sum(vm)                                       # scalar: valid pixel count

    ones_col = jnp.ones((C, 1), jnp.float32)
    acc_ref[:, 0:1] += inter
    acc_ref[:, 1:2] += psum
    acc_ref[:, 2:3] += tsum
    acc_ref[:, 3:4] += tp
    acc_ref[:, 4:5] += prsum
    acc_ref[:, 5:6] += ce * ones_col
    acc_ref[:, 6:7] += cnt * ones_col

    @pl.when(t == pl.num_programs(1) - 1)
    def _writeback():
        stats_ref[0] = acc_ref[...]


# ----------------------------------------------------------------------------
# Wrapper: TrainingModel.forward
# ----------------------------------------------------------------------------
def training_model_forward(images, targets, masks, conv_w, conv_b, leaf_mask, reach_cls,
                           *, tile_p=None):
    B, K, H, Wd = images.shape
    P = H * Wd
    C = conv_w.shape[0]
    if tile_p is None:
        tile_p = P if P <= 4096 else 4096                     # big tiles; one tile/sample if small
    assert P % tile_p == 0 and tile_p % 128 == 0
    T = P // tile_p

    x = images.reshape(B, K, P).astype(jnp.float32)           # free reshape of NCHW (no transpose)
    y3 = targets.reshape(B, 1, P).astype(jnp.int32)           # lane-dense label stream
    w = conv_w.astype(jnp.float32)                            # (C, K)
    b2 = conv_b.reshape(C, 1).astype(jnp.float32)
    leaf2 = leaf_mask.reshape(C, 1).astype(jnp.float32)
    rm = reach_cls.astype(jnp.float32)                        # (C, C)

    grid = (B, T)
    pred, stats = pl.pallas_call(
        functools.partial(fused_forward_kernel, eps=1e-7),
        out_shape=(jax.ShapeDtypeStruct((B, 1, P), jnp.int32),
                   jax.ShapeDtypeStruct((B, C, 8), jnp.float32)),
        grid_spec=pltpu.PrefetchScalarGridSpec(
            num_scalar_prefetch=0, grid=grid,
            in_specs=[pl.BlockSpec((1, K, tile_p), lambda b, t: (b, 0, t)),
                      pl.BlockSpec((1, 1, tile_p), lambda b, t: (b, 0, t)),
                      pl.BlockSpec((C, K), lambda b, t: (0, 0)),
                      pl.BlockSpec((C, 1), lambda b, t: (0, 0)),
                      pl.BlockSpec((C, 1), lambda b, t: (0, 0)),
                      pl.BlockSpec((C, C), lambda b, t: (0, 0))],
            out_specs=[pl.BlockSpec((1, 1, tile_p), lambda b, t: (b, 0, t)),
                       pl.BlockSpec((1, C, 8), lambda b, t: (b, 0, 0))],
            scratch_shapes=[pltpu.VMEM((C, 8), jnp.float32)]),
        compiler_params=pltpu.CompilerParams(
            dimension_semantics=("parallel", "arbitrary"),     # batch parallel (v7x megacore)
            vmem_limit_bytes=32 * 1024 * 1024),                # explicit budget; safe on v5e/v6e/v7x
    )(x, y3, w, b2, leaf2, rm)

    inter, psum, tsum = stats[:, :, 0], stats[:, :, 1], stats[:, :, 2]
    tp, prsum = stats[:, :, 3], stats[:, :, 4]
    ce_sum, cnt = stats[:, 0, 5], stats[:, 0, 6]
    fp = prsum - tp                                            # exact (0/1 indicators, f32 int sums)
    fn = tsum - tp

    ce = ce_sum / cnt                                          # mean CE over valid pixels
    # (NaN if every pixel of a sample is ignore-labelled — matches torch's mean over empty.)
    smooth_nr, smooth_dr = 0.0, 1e-5                           # DiceLoss(smooth_nr=0.0), MONAI default smooth_dr
    dice = jnp.mean(1.0 - (2.0 * inter + smooth_nr) / (psum + tsum + smooth_dr), axis=-1)
    sink_dice = jnp.zeros_like(ce)                             # sink_mask == zeros in this config
    loss = jnp.stack([ce, dice, sink_dice], axis=-1)           # (B, 3)

    # confusion-matrix update; torch uses float64 — kept float32 here (exact integer counts
    # while per-class counts stay below 2^24 pixels).
    cm_update = jnp.stack([tp, fp, fn], axis=-1) * masks.astype(jnp.float32)[:, :, None]  # (B, C, 3)

    yhat_preds = pred.reshape(B, H, Wd)                        # (B, H, W) int32
    return loss, cm_update, yhat_preds


# ----------------------------------------------------------------------------
if __name__ == "__main__":
    # class tree: root -> {A, B}; A -> {A1, A2}; B -> {B1, B2}
    # classes (root stripped):  A=0, B=1, A1=2, A2=3, B1=4, B2=5   (leaves: 2,3,4,5)
    num_classes = 6
    n = num_classes + 1
    adjacency = np.zeros((n, n), dtype=np.int64)
    adjacency[0, 1] = adjacency[0, 2] = 1
    adjacency[1, 3] = adjacency[1, 4] = 1
    adjacency[2, 5] = adjacency[2, 6] = 1

    reach = reachability_from_adjacency_matrix(adjacency)
    reach_cls = jnp.asarray(reach[1:, 1:], dtype=jnp.float32)     # reach_cls[c, j]: c anc-or-self of j
    leaf_mask = jnp.asarray((adjacency[1:, 1:].sum(axis=1) == 0).astype(np.float32))
    bitmask_classes, bitmask_groups = bitpack_tree(adjacency)     # parity with __init__ (see header)

    B, K, H, Wd = 2, 4, 16, 16
    key = jax.random.PRNGKey(0)
    k1, k2, k3, k4 = jax.random.split(key, 4)

    images = jax.random.normal(k1, (B, K, H, Wd), dtype=jnp.float32)      # NCHW like PyTorch
    raw = jax.random.randint(k2, (B, H, Wd), 0, num_classes + 1)
    targets = jnp.where(raw == num_classes, 255, raw).astype(jnp.int32)   # include ignore label 255
    masks = jnp.ones((B, num_classes), dtype=jnp.int32)

    # deterministic base_model params (1x1 conv: K -> num_classes)
    conv_w = jax.random.normal(k3, (num_classes, K), dtype=jnp.float32) * 0.5
    conv_b = jax.random.normal(k4, (num_classes,), dtype=jnp.float32) * 0.1

    fwd = jax.jit(training_model_forward)
    loss, cm_update, yhat_preds = fwd(images, targets, masks, conv_w, conv_b, leaf_mask, reach_cls)
    jax.block_until_ready((loss, cm_update, yhat_preds))

    assert loss.shape == (B, 3)
    assert cm_update.shape == (B, num_classes, 3)
    assert yhat_preds.shape == (B, H, Wd)
    print("KERNEL_OK")
</pallas_src>

<mosaic_0001>
module attributes {stable_mosaic.version = 11 : i64} {
  func.func @fused_forward_kernel(%arg0: i32, %arg1: i32, %arg2: memref<1x4x256xf32, #tpu.memory_space<vmem>>, %arg3: memref<1x1x256xi32, #tpu.memory_space<vmem>>, %arg4: memref<6x4xf32, #tpu.memory_space<vmem>>, %arg5: memref<6x1xf32, #tpu.memory_space<vmem>>, %arg6: memref<6x1xf32, #tpu.memory_space<vmem>>, %arg7: memref<6x6xf32, #tpu.memory_space<vmem>>, %arg8: memref<1x1x256xi32, #tpu.memory_space<vmem>>, %arg9: memref<1x6x8xf32, #tpu.memory_space<vmem>>, %arg10: memref<6x8xf32, #tpu.memory_space<vmem>>) attributes {dimension_semantics = [#tpu.dimension_semantics<parallel>, #tpu.dimension_semantics<arbitrary>], iteration_bounds = array<i64: 2, 1>, scalar_prefetch = 0 : i64, scratch_operands = 1 : i64, tpu.core_type = #tpu.core_type<tc>, window_params = [{transform_indices = @transform_0, window_bounds = array<i64: 1, 4, 256>}, {transform_indices = @transform_1, window_bounds = array<i64: 1, 1, 256>}, {pipeline_mode = #tpu.pipeline_mode<synchronous>, transform_indices = @transform_2, window_bounds = array<i64: 6, 4>}, {pipeline_mode = #tpu.pipeline_mode<synchronous>, transform_indices = @transform_3, window_bounds = array<i64: 6, 1>}, {pipeline_mode = #tpu.pipeline_mode<synchronous>, transform_indices = @transform_4, window_bounds = array<i64: 6, 1>}, {pipeline_mode = #tpu.pipeline_mode<synchronous>, transform_indices = @transform_5, window_bounds = array<i64: 6, 6>}, {transform_indices = @transform_6, window_bounds = array<i64: 1, 1, 256>}, {transform_indices = @transform_7, window_bounds = array<i64: 1, 6, 8>}]} {
    %c0_i32 = arith.constant 0 : i32
    %0 = arith.cmpi eq, %arg1, %c0_i32 : i32
    %1 = arith.extui %0 : i1 to i32
    %c0_i32_0 = arith.constant 0 : i32
    %2 = arith.cmpi ne, %1, %c0_i32_0 : i32
    scf.if %2 {
      %cst_62 = arith.constant 0.000000e+00 : f32
      %127 = vector.broadcast %cst_62 : f32 to vector<6x8xf32>
      %c0_63 = arith.constant 0 : index
      %c0_64 = arith.constant 0 : index
      %128 = vector.load %arg10[%c0_63, %c0_64] : memref<6x8xf32, #tpu.memory_space<vmem>>, vector<6x8xf32>
      tpu.vector_store %arg10[%c0_63, %c0_64], %127 {strides = array<i32>} : memref<6x8xf32, #tpu.memory_space<vmem>>, vector<6x8xf32>,
    } else {
    }
    %c0 = arith.constant 0 : index
    %c0_1 = arith.constant 0 : index
    %c0_2 = arith.constant 0 : index
    %3 = vector.load %arg2[%c0, %c0_1, %c0_2] : memref<1x4x256xf32, #tpu.memory_space<vmem>>, vector<1x4x256xf32>
    %4 = vector.shape_cast %3 : vector<1x4x256xf32> to vector<4x256xf32>
    %c0_3 = arith.constant 0 : index
    %c0_4 = arith.constant 0 : index
    %5 = vector.load %arg4[%c0_3, %c0_4] : memref<6x4xf32, #tpu.memory_space<vmem>>, vector<6x4xf32>
    %cst = arith.constant dense<0.000000e+00> : vector<6x256xf32>
    %6 = tpu.matmul %5, %4, %cst {dimension_numbers = #tpu.dot_dimension_numbers<[1], [0], [0], [1], [0, 0, 1, 1], [], []>} : vector<6x4xf32>, vector<4x256xf32>, vector<6x256xf32> -> vector<6x256xf32>
    %c0_5 = arith.constant 0 : index
    %c0_6 = arith.constant 0 : index
    %7 = vector.load %arg5[%c0_5, %c0_6] : memref<6x1xf32, #tpu.memory_space<vmem>>, vector<6x1xf32>
    %8 = vector.broadcast %7 : vector<6x1xf32> to vector<6x256xf32>
    %9 = arith.addf %6, %8 : vector<6x256xf32>
    %cst_7 = arith.constant dense<0xFF800000> : vector<256xf32>
    %10 = vector.multi_reduction <maximumf>, %9, %cst_7 [0] : vector<6x256xf32> to vector<256xf32>
    %11 = vector.shape_cast %10 : vector<256xf32> to vector<1x256xf32>
    %12 = vector.broadcast %11 : vector<1x256xf32> to vector<6x256xf32>
    %13 = arith.subf %9, %12 : vector<6x256xf32>
    %14 = math.exp %13 : vector<6x256xf32>
    %cst_8 = arith.constant dense<0.000000e+00> : vector<256xf32>
    %15 = vector.multi_reduction <add>, %14, %cst_8 [0] : vector<6x256xf32> to vector<256xf32>
    %16 = vector.shape_cast %15 : vector<256xf32> to vector<1x256xf32>
    %17 = tpu.reciprocal %16 {approx = true} : vector<1x256xf32> -> vector<1x256xf32>
    %18 = vector.broadcast %17 : vector<1x256xf32> to vector<6x256xf32>
    %19 = arith.mulf %14, %18 : vector<6x256xf32>
    %20 = vector.broadcast %11 : vector<1x256xf32> to vector<6x256xf32>
    %21 = arith.subf %9, %20 : vector<6x256xf32>
    %22 = math.log %16 : vector<1x256xf32>
    %23 = vector.broadcast %22 : vector<1x256xf32> to vector<6x256xf32>
    %24 = arith.subf %21, %23 : vector<6x256xf32>
    %cst_9 = arith.constant -16.1180954 : f32
    %cst_10 = arith.constant -1.00000008E-7 : f32
    %25 = vector.broadcast %cst_9 : f32 to vector<6x256xf32>
    %26 = arith.maximumf %25, %24 : vector<6x256xf32>
    %27 = vector.broadcast %cst_10 : f32 to vector<6x256xf32>
    %28 = arith.minimumf %27, %26 : vector<6x256xf32>
    %29 = tpu.iota {dimensions = array<i32: 0>} : vector<6x256xi32>
    %c0_11 = arith.constant 0 : index
    %c0_12 = arith.constant 0 : index
    %30 = vector.load %arg6[%c0_11, %c0_12] : memref<6x1xf32, #tpu.memory_space<vmem>>, vector<6x1xf32>
    %cst_13 = arith.constant 0.000000e+00 : f32
    %31 = vector.broadcast %cst_13 : f32 to vector<6x1xf32>
    %32 = arith.cmpf ogt, %30, %31 : vector<6x1xf32>
    %cst_14 = arith.constant 0xFF800000 : f32
    %33 = vector.shape_cast %32 : vector<6x1xi1> to vector<6x1xi1>
    %34 = vector.broadcast %33 : vector<6x1xi1> to vector<6x256xi1>
    %35 = vector.broadcast %cst_14 : f32 to vector<6x256xf32>
    %36 = arith.select %34, %9, %35 : vector<6x256xi1>, vector<6x256xf32>
    %cst_15 = arith.constant dense<0xFF800000> : vector<256xf32>
    %37 = vector.multi_reduction <maximumf>, %36, %cst_15 [0] : vector<6x256xf32> to vector<256xf32>
    %38 = vector.shape_cast %37 : vector<256xf32> to vector<1x256xf32>
    %39 = vector.broadcast %38 : vector<1x256xf32> to vector<6x256xf32>
    %40 = arith.cmpf oeq, %36, %39 : vector<6x256xf32>
    %41 = arith.sitofp %29 : vector<6x256xi32> to vector<6x256xf32>
    %cst_16 = arith.constant 6.000000e+00 : f32
    %42 = vector.broadcast %cst_16 : f32 to vector<6x256xf32>
    %43 = arith.select %40, %41, %42 : vector<6x256xi1>, vector<6x256xf32>
    %cst_17 = arith.constant dense<0x7F800000> : vector<256xf32>
    %44 = vector.multi_reduction <minimumf>, %43, %cst_17 [0] : vector<6x256xf32> to vector<256xf32>
    %45 = vector.shape_cast %44 : vector<256xf32> to vector<1x256xf32>
    %46 = arith.fptosi %45 : vector<1x256xf32> to vector<1x256xi32>
    %c0_18 = arith.constant 0 : index
    %c0_19 = arith.constant 0 : index
    %c0_20 = arith.constant 0 : index
    %47 = vector.load %arg8[%c0_18, %c0_19, %c0_20] : memref<1x1x256xi32, #tpu.memory_space<vmem>>, vector<1x1x256xi32>
    %48 = vector.shape_cast %47 : vector<1x1x256xi32> to vector<1x256xi32>
    %49 = vector.shape_cast %46 : vector<1x256xi32> to vector<1x1x256xi32>
    tpu.vector_store %arg8[%c0_18, %c0_19, %c0_20], %49 {strides = array<i32>} : memref<1x1x256xi32, #tpu.memory_space<vmem>>, vector<1x1x256xi32>,
    %c0_21 = arith.constant 0 : index
    %c0_22 = arith.constant 0 : index
    %c0_23 = arith.constant 0 : index
    %50 = vector.load %arg3[%c0_21, %c0_22, %c0_23] : memref<1x1x256xi32, #tpu.memory_space<vmem>>, vector<1x1x256xi32>
    %51 = vector.shape_cast %50 : vector<1x1x256xi32> to vector<1x256xi32>
    %c255_i32 = arith.constant 255 : i32
    %52 = vector.broadcast %c255_i32 : i32 to vector<1x256xi32>
    %53 = arith.cmpi ne, %51, %52 : vector<1x256xi32>
    %54 = arith.extui %53 : vector<1x256xi1> to vector<1x256xi32>
    %55 = arith.sitofp %54 : vector<1x256xi32> to vector<1x256xf32>
    %c0_i32_24 = arith.constant 0 : i32
    %56 = vector.broadcast %c0_i32_24 : i32 to vector<1x256xi32>
    %57 = arith.select %53, %51, %56 : vector<1x256xi1>, vector<1x256xi32>
    %58 = vector.broadcast %57 : vector<1x256xi32> to vector<6x256xi32>
    %59 = arith.cmpi eq, %29, %58 : vector<6x256xi32>
    %60 = arith.extui %59 : vector<6x256xi1> to vector<6x256xi32>
    %61 = arith.sitofp %60 : vector<6x256xi32> to vector<6x256xf32>
    %62 = vector.broadcast %46 : vector<1x256xi32> to vector<6x256xi32>
    %63 = arith.cmpi eq, %29, %62 : vector<6x256xi32>
    %64 = arith.extui %63 : vector<6x256xi1> to vector<6x256xi32>
    %65 = arith.sitofp %64 : vector<6x256xi32> to vector<6x256xf32>
    %c0_25 = arith.constant 0 : index
    %c0_26 = arith.constant 0 : index
    %66 = vector.load %arg7[%c0_25, %c0_26] : memref<6x6xf32, #tpu.memory_space<vmem>>, vector<6x6xf32>
    %cst_27 = arith.constant dense<0.000000e+00> : vector<6x256xf32>
    %67 = tpu.matmul %66, %61, %cst_27 {dimension_numbers = #tpu.dot_dimension_numbers<[1], [0], [0], [1], [0, 0, 1, 1], [], []>} : vector<6x6xf32>, vector<6x256xf32>, vector<6x256xf32> -> vector<6x256xf32>
    %cst_28 = arith.constant dense<0.000000e+00> : vector<6x256xf32>
    %68 = tpu.matmul %66, %65, %cst_28 {dimension_numbers = #tpu.dot_dimension_numbers<[1], [0], [0], [1], [0, 0, 1, 1], [], []>} : vector<6x6xf32>, vector<6x256xf32>, vector<6x256xf32> -> vector<6x256xf32>
    %69 = vector.broadcast %55 : vector<1x256xf32> to vector<6x256xf32>
    %70 = arith.mulf %69, %67 : vector<6x256xf32>
    %71 = arith.mulf %70, %19 : vector<6x256xf32>
    %cst_29 = arith.constant dense<0.000000e+00> : vector<6xf32>
    %72 = vector.multi_reduction <add>, %71, %cst_29 [1] : vector<6x256xf32> to vector<6xf32>
    %73 = vector.shape_cast %72 : vector<6xf32> to vector<6x1xf32>
    %74 = vector.broadcast %55 : vector<1x256xf32> to vector<6x256xf32>
    %75 = arith.mulf %74, %19 : vector<6x256xf32>
    %cst_30 = arith.constant dense<0.000000e+00> : vector<6xf32>
    %76 = vector.multi_reduction <add>, %75, %cst_30 [1] : vector<6x256xf32> to vector<6xf32>
    %77 = vector.shape_cast %76 : vector<6xf32> to vector<6x1xf32>
    %cst_31 = arith.constant dense<0.000000e+00> : vector<6xf32>
    %78 = vector.multi_reduction <add>, %70, %cst_31 [1] : vector<6x256xf32> to vector<6xf32>
    %79 = vector.shape_cast %78 : vector<6xf32> to vector<6x1xf32>
    %80 = arith.mulf %70, %68 : vector<6x256xf32>
    %cst_32 = arith.constant dense<0.000000e+00> : vector<6xf32>
    %81 = vector.multi_reduction <add>, %80, %cst_32 [1] : vector<6x256xf32> to vector<6xf32>
    %82 = vector.shape_cast %81 : vector<6xf32> to vector<6x1xf32>
    %83 = vector.broadcast %55 : vector<1x256xf32> to vector<6x256xf32>
    %84 = arith.mulf %83, %68 : vector<6x256xf32>
    %cst_33 = arith.constant dense<0.000000e+00> : vector<6xf32>
    %85 = vector.multi_reduction <add>, %84, %cst_33 [1] : vector<6x256xf32> to vector<6xf32>
    %86 = vector.shape_cast %85 : vector<6xf32> to vector<6x1xf32>
    %cst_34 = arith.constant 0.000000e+00 : f32
    %87 = vector.broadcast %cst_34 : f32 to vector<6x256xf32>
    %88 = arith.subf %87, %28 : vector<6x256xf32>
    %89 = arith.mulf %70, %88 : vector<6x256xf32>
    %90 = vector.shape_cast %89 : vector<6x256xf32> to vector<1x6x256xf32>
    %cst_35 = arith.constant dense<0.000000e+00> : vector<1xf32>
    %91 = vector.multi_reduction <add>, %90, %cst_35 [1, 2] : vector<1x6x256xf32> to vector<1xf32>
    %92 = vector.shape_cast %91 : vector<1xf32> to vector<1x1x1xf32>
    %93 = vector.extract %92[0, 0, 0] : f32 from vector<1x1x1xf32>
    %94 = vector.shape_cast %55 : vector<1x256xf32> to vector<1x1x256xf32>
    %cst_36 = arith.constant dense<0.000000e+00> : vector<1xf32>
    %95 = vector.multi_reduction <add>, %94, %cst_36 [1, 2] : vector<1x1x256xf32> to vector<1xf32>
    %96 = vector.shape_cast %95 : vector<1xf32> to vector<1x1x1xf32>
    %97 = vector.extract %96[0, 0, 0] : f32 from vector<1x1x1xf32>
    %cst_37 = arith.constant 1.000000e+00 : f32
    %98 = vector.broadcast %cst_37 : f32 to vector<6x1xf32>
    %c0_38 = arith.constant 0 : index
    %c0_39 = arith.constant 0 : index
    %99 = vector.load %arg10[%c0_38, %c0_39] : memref<6x8xf32, #tpu.memory_space<vmem>>, vector<6x1xf32>
    %100 = arith.addf %99, %73 : vector<6x1xf32>
    %c0_40 = arith.constant 0 : index
    %c0_41 = arith.constant 0 : index
    %101 = vector.load %arg10[%c0_40, %c0_41] : memref<6x8xf32, #tpu.memory_space<vmem>>, vector<6x1xf32>
    tpu.vector_store %arg10[%c0_40, %c0_41], %100 {strides = array<i32>} : memref<6x8xf32, #tpu.memory_space<vmem>>, vector<6x1xf32>,
    %c0_42 = arith.constant 0 : index
    %c1 = arith.constant 1 : index
    %102 = vector.load %arg10[%c0_42, %c1] : memref<6x8xf32, #tpu.memory_space<vmem>>, vector<6x1xf32>
    %103 = arith.addf %102, %77 : vector<6x1xf32>
    %c0_43 = arith.constant 0 : index
    %c1_44 = arith.constant 1 : index
    %104 = vector.load %arg10[%c0_43, %c1_44] : memref<6x8xf32, #tpu.memory_space<vmem>>, vector<6x1xf32>
    tpu.vector_store %arg10[%c0_43, %c1_44], %103 {strides = array<i32>} : memref<6x8xf32, #tpu.memory_space<vmem>>, vector<6x1xf32>,
    %c0_45 = arith.constant 0 : index
    %c2 = arith.constant 2 : index
    %105 = vector.load %arg10[%c0_45, %c2] : memref<6x8xf32, #tpu.memory_space<vmem>>, vector<6x1xf32>
    %106 = arith.addf %105, %79 : vector<6x1xf32>
    %c0_46 = arith.constant 0 : index
    %c2_47 = arith.constant 2 : index
    %107 = vector.load %arg10[%c0_46, %c2_47] : memref<6x8xf32, #tpu.memory_space<vmem>>, vector<6x1xf32>
    tpu.vector_store %arg10[%c0_46, %c2_47], %106 {strides = array<i32>} : memref<6x8xf32, #tpu.memory_space<vmem>>, vector<6x1xf32>,
    %c0_48 = arith.constant 0 : index
    %c3 = arith.constant 3 : index
    %108 = vector.load %arg10[%c0_48, %c3] : memref<6x8xf32, #tpu.memory_space<vmem>>, vector<6x1xf32>
    %109 = arith.addf %108, %82 : vector<6x1xf32>
    %c0_49 = arith.constant 0 : index
    %c3_50 = arith.constant 3 : index
    %110 = vector.load %arg10[%c0_49, %c3_50] : memref<6x8xf32, #tpu.memory_space<vmem>>, vector<6x1xf32>
    tpu.vector_store %arg10[%c0_49, %c3_50], %109 {strides = array<i32>} : memref<6x8xf32, #tpu.memory_space<vmem>>, vector<6x1xf32>,
    %c0_51 = arith.constant 0 : index
    %c4 = arith.constant 4 : index
    %111 = vector.load %arg10[%c0_51, %c4] : memref<6x8xf32, #tpu.memory_space<vmem>>, vector<6x1xf32>
    %112 = arith.addf %111, %86 : vector<6x1xf32>
    %c0_52 = arith.constant 0 : index
    %c4_53 = arith.constant 4 : index
    %113 = vector.load %arg10[%c0_52, %c4_53] : memref<6x8xf32, #tpu.memory_space<vmem>>, vector<6x1xf32>
    tpu.vector_store %arg10[%c0_52, %c4_53], %112 {strides = array<i32>} : memref<6x8xf32, #tpu.memory_space<vmem>>, vector<6x1xf32>,
    %c0_54 = arith.constant 0 : index
    %c5 = arith.constant 5 : index
    %114 = vector.load %arg10[%c0_54, %c5] : memref<6x8xf32, #tpu.memory_space<vmem>>, vector<6x1xf32>
    %115 = vector.broadcast %93 : f32 to vector<6x1xf32>
    %116 = arith.mulf %115, %98 : vector<6x1xf32>
    %117 = arith.addf %114, %116 : vector<6x1xf32>
    %c0_55 = arith.constant 0 : index
    %c5_56 = arith.constant 5 : index
    %118 = vector.load %arg10[%c0_55, %c5_56] : memref<6x8xf32, #tpu.memory_space<vmem>>, vector<6x1xf32>
    tpu.vector_store %arg10[%c0_55, %c5_56], %117 {strides = array<i32>} : memref<6x8xf32, #tpu.memory_space<vmem>>, vector<6x1xf32>,
    %c0_57 = arith.constant 0 : index
    %c6 = arith.constant 6 : index
    %119 = vector.load %arg10[%c0_57, %c6] : memref<6x8xf32, #tpu.memory_space<vmem>>, vector<6x1xf32>
    %120 = vector.broadcast %97 : f32 to vector<6x1xf32>
    %121 = arith.mulf %120, %98 : vector<6x1xf32>
    %122 = arith.addf %119, %121 : vector<6x1xf32>
    %c0_58 = arith.constant 0 : index
    %c6_59 = arith.constant 6 : index
    %123 = vector.load %arg10[%c0_58, %c6_59] : memref<6x8xf32, #tpu.memory_space<vmem>>, vector<6x1xf32>
    tpu.vector_store %arg10[%c0_58, %c6_59], %122 {strides = array<i32>} : memref<6x8xf32, #tpu.memory_space<vmem>>, vector<6x1xf32>,
    %c0_i32_60 = arith.constant 0 : i32
    %124 = arith.cmpi eq, %arg1, %c0_i32_60 : i32
    %125 = arith.extui %124 : i1 to i32
    %c0_i32_61 = arith.constant 0 : i32
    %126 = arith.cmpi ne, %125, %c0_i32_61 : i32
    scf.if %126 {
      %c0_62 = arith.constant 0 : index
      %c0_63 = arith.constant 0 : index
      %127 = vector.load %arg10[%c0_62, %c0_63] : memref<6x8xf32, #tpu.memory_space<vmem>>, vector<6x8xf32>
      %c0_64 = arith.constant 0 : index
      %c0_65 = arith.constant 0 : index
      %c0_66 = arith.constant 0 : index
      %128 = vector.load %arg9[%c0_64, %c0_65, %c0_66] : memref<1x6x8xf32, #tpu.memory_space<vmem>>, vector<1x6x8xf32>
      %129 = vector.shape_cast %128 : vector<1x6x8xf32> to vector<6x8xf32>
      %130 = vector.shape_cast %127 : vector<6x8xf32> to vector<1x6x8xf32>
      tpu.vector_store %arg9[%c0_64, %c0_65, %c0_66], %130 {strides = array<i32>} : memref<1x6x8xf32, #tpu.memory_space<vmem>>, vector<1x6x8xf32>,
    } else {
    }
    return
  }
  func.func @transform_0(%arg0: i32, %arg1: i32) -> (i32, i32, i32) {
    %c0_i32 = arith.constant 0 : i32
    %c0_i32_0 = arith.constant 0 : i32
    return %arg0, %c0_i32, %arg1 : i32, i32, i32
  }
  func.func @transform_1(%arg0: i32, %arg1: i32) -> (i32, i32, i32) {
    %c0_i32 = arith.constant 0 : i32
    %c0_i32_0 = arith.constant 0 : i32
    return %arg0, %c0_i32, %arg1 : i32, i32, i32
  }
  func.func @transform_2(%arg0: i32, %arg1: i32) -> (i32, i32) {
    %c0_i32 = arith.constant 0 : i32
    %c0_i32_0 = arith.constant 0 : i32
    %c0_i32_1 = arith.constant 0 : i32
    return %c0_i32, %c0_i32_0 : i32, i32
  }
  func.func @transform_3(%arg0: i32, %arg1: i32) -> (i32, i32) {
    %c0_i32 = arith.constant 0 : i32
    %c0_i32_0 = arith.constant 0 : i32
    %c0_i32_1 = arith.constant 0 : i32
    return %c0_i32, %c0_i32_0 : i32, i32
  }
  func.func @transform_4(%arg0: i32, %arg1: i32) -> (i32, i32) {
    %c0_i32 = arith.constant 0 : i32
    %c0_i32_0 = arith.constant 0 : i32
    %c0_i32_1 = arith.constant 0 : i32
    return %c0_i32, %c0_i32_0 : i32, i32
  }
  func.func @transform_5(%arg0: i32, %arg1: i32) -> (i32, i32) {
    %c0_i32 = arith.constant 0 : i32
    %c0_i32_0 = arith.constant 0 : i32
    %c0_i32_1 = arith.constant 0 : i32
    return %c0_i32, %c0_i32_0 : i32, i32
  }
  func.func @transform_6(%arg0: i32, %arg1: i32) -> (i32, i32, i32) {
    %c0_i32 = arith.constant 0 : i32
    %c0_i32_0 = arith.constant 0 : i32
    return %arg0, %c0_i32, %arg1 : i32, i32, i32
  }
  func.func @transform_7(%arg0: i32, %arg1: i32) -> (i32, i32, i32) {
    %c0_i32 = arith.constant 0 : i32
    %c0_i32_0 = arith.constant 0 : i32
    %c0_i32_1 = arith.constant 0 : i32
    return %arg0, %c0_i32, %c0_i32_0 : i32, i32, i32
  }
}

</mosaic_0001>

<llo_original>
// kernel: training_model_forward.1
$region0: #{training_model_forward.1}
  #allocation0 [shape = 'u32[]', space=smem, size = 0x4, offset = 0x4, fixed_abs, tag = 'smem constant byte address 0x4 - core index']
  #allocation1 [shape = 'u32[144,128]{1,0:T(1,128)}', space=vmem, size = 0x12000, scoped, tag = 'internal scratch']
  #allocation2 [shape = 'f32[6,8]{1,0:T(8,128)}', space=vmem, size = 0x1000, scoped, tag = 'scratch operand']
  %s0 = inlined_call_operand.vmem [shape: f32[2,4,256], index: 0, kind: input, shape index: {}]
  %s1 = inlined_call_operand.vmem [shape: s32[2,1,256], index: 1, kind: input, shape index: {}]
  %s2 = inlined_call_operand.vmem [shape: f32[6,4], index: 2, kind: input, shape index: {}]
  %s3 = inlined_call_operand.vmem [shape: f32[6,1], index: 3, kind: input, shape index: {}]
  %s4 = inlined_call_operand.vmem [shape: f32[6,1], index: 4, kind: input, shape index: {}]
  %s5 = inlined_call_operand.vmem [shape: f32[6,6], index: 5, kind: input, shape index: {}]
  %s6 = inlined_call_operand.vmem [shape: s32[2,1,256], index: 6, kind: output, shape index: {0}]
  %s7 = inlined_call_operand.vmem [shape: f32[2,6,8], index: 7, kind: output, shape index: {1}]
  %8 = xla_tuple %s6, %s7
  %s9 = sld [smem:[#allocation0]]
  $region73: #{training_model_forward.1} parent=0
    _
  %s11 = ssub.s32 1, %s9
  %s12 = scalar_select 0, %s11, %s9
  loop: start=0, step=1, limit=4
  $region2: #{training_model_forward.1} parent=0 // loop_pre_header
    _
  $region3: #{training_model_forward.1} parent=0 // loop_header
    %s14 = sphi 0, %s18
    %p15 = scmp.ge.s32.totalorder %s14, 4
    %s21 = sphi 0, %s33
    %s22 = sphi 0, %s29
    %s23 = sphi 0, %s21
    %s24 = sphi 0, %s22
    %s25 = sphi 0, %s23
    %s26 = sphi 0, %s24
    %s38 = sphi 0, %s40
    %s41 = sphi 0, %s38
    %s42 = sphi 0, %s41
    %s58 = sphi 0, %s42
    %s66 = sphi 0, %s68
    %s69 = sphi 0, %s66
    %s70 = sphi 0, %s69
    %s86 = sphi 0, %s70
    %s90 = sphi 0, %s90
    %s92 = sphi 0, %s90
    %s93 = sphi 0, %s92
    %s107 = sphi 0, %s93
    %s111 = sphi 0, %s111
    %s113 = sphi 0, %s111
    %s114 = sphi 0, %s113
    %s128 = sphi 0, %s114
    %s132 = sphi 0, %s132
    %s134 = sphi 0, %s132
    %s135 = sphi 0, %s134
    %s149 = sphi 0, %s135
    %s153 = sphi 0, %s153
    %s155 = sphi 0, %s153
    %s156 = sphi 0, %s155
    %s170 = sphi 0, %s156
    %s178 = sphi 0, %s180
    %s181 = sphi 0, %s178
    %s182 = sphi 0, %s181
    %s198 = sphi 0, %s182
    %s204 = sphi 0, %s206
    %s207 = sphi 0, %s204
    %s208 = sphi 0, %s207
    %s224 = sphi 0, %s208
  $region4: #{training_model_forward.1} parent=0 // loop_header_branch
    %17 = sbr.rel (%p15) target = $region8
  $region5: #{training_model_forward.1} parent=0 // loop_body
    %s19 = ssub.s32 %s14, 1
    %s20 = ssub.s32 %s14, 2
    %s27 = sadd.s32 1, %s22
    %p28 = scmp.ge.s32.totalorder %s27, 1
    %s29 = scalar_select %p28, 0, %s27
    %s30 = sadd.s32 1, %s21
    %s31 = scalar_select %p28, %s30, %s21
    %p32 = scmp.ge.s32.totalorder %s31, 2
    %s33 = scalar_select %p32, 0, %s31
    %s34 = ssub.s32 %s21, %s33
    %s35 = ssub.s32 %s22, %s29
    %s36 = sor.u32 %s34, %s35
    %p37 = scmp.eq.s32.totalorder %s36, 0
    %s39 = sadd.s32 %s38, 1
    %s40 = scalar_select %p37, %s38, %s39
    %p43 = pneg %p37
    %p44 = scmp.eq.s32.totalorder %s14, 1
    %p45 = por %p43, %p44
    %p46 = scmp.ne.s32.totalorder %s38, %s41
    %p47 = scmp.eq.s32.totalorder %s14, 0
    %p48 = por %p46, %p47
    %p49 = scmp.ne.s32.totalorder %s38, %s41
    %p50 = scmp.eq.s32.totalorder %s19, 1
    %p51 = por %p49, %p50
    %p52 = scmp.ne.s32.totalorder %s41, %s42
    %p53 = scmp.eq.s32.totalorder %s19, 0
    %p54 = por %p52, %p53
    %p55 = scmp.ne.s32.totalorder %s41, %s42
    %p56 = scmp.eq.s32.totalorder %s20, 1
    %p57 = por %p55, %p56
    %p59 = scmp.ne.s32.totalorder %s42, %s58
    %p60 = scmp.eq.s32.totalorder %s20, 0
    %p61 = por %p59, %p60
    %s62 = ssub.s32 %s21, %s33
    %s63 = ssub.s32 %s22, %s29
    %s64 = sor.u32 %s62, %s63
    %p65 = scmp.eq.s32.totalorder %s64, 0
    %s67 = sadd.s32 %s66, 1
    %s68 = scalar_select %p65, %s66, %s67
    %p71 = pneg %p65
    %p72 = scmp.eq.s32.totalorder %s14, 1
    %p73 = por %p71, %p72
    %p74 = scmp.ne.s32.totalorder %s66, %s69
    %p75 = scmp.eq.s32.totalorder %s14, 0
    %p76 = por %p74, %p75
    %p77 = scmp.ne.s32.totalorder %s66, %s69
    %p78 = scmp.eq.s32.totalorder %s19, 1
    %p79 = por %p77, %p78
    %p80 = scmp.ne.s32.totalorder %s69, %s70
    %p81 = scmp.eq.s32.totalorder %s19, 0
    %p82 = por %p80, %p81
    %p83 = scmp.ne.s32.totalorder %s69, %s70
    %p84 = scmp.eq.s32.totalorder %s20, 1
    %p85 = por %p83, %p84
    %p87 = scmp.ne.s32.totalorder %s70, %s86
    %p88 = scmp.eq.s32.totalorder %s20, 0
    %p89 = por %p87, %p88
    %s91 = sadd.s32 %s90, 1
    %p94 = scmp.eq.s32.totalorder %s14, 1
    %p95 = scmp.ne.s32.totalorder %s90, %s92
    %p96 = scmp.eq.s32.totalorder %s14, 0
    %p97 = por %p95, %p96
    %p98 = scmp.ne.s32.totalorder %s90, %s92
    %p99 = scmp.eq.s32.totalorder %s19, 1
    %p100 = por %p98, %p99
    %p101 = scmp.ne.s32.totalorder %s92, %s93
    %p102 = scmp.eq.s32.totalorder %s19, 0
    %p103 = por %p101, %p102
    %p104 = scmp.ne.s32.totalorder %s92, %s93
    %p105 = scmp.eq.s32.totalorder %s20, 1
    %p106 = por %p104, %p105
    %p108 = scmp.ne.s32.totalorder %s93, %s107
    %p109 = scmp.eq.s32.totalorder %s20, 0
    %p110 = por %p108, %p109
    %s112 = sadd.s32 %s111, 1
    %p115 = scmp.eq.s32.totalorder %s14, 1
    %p116 = scmp.ne.s32.totalorder %s111, %s113
    %p117 = scmp.eq.s32.totalorder %s14, 0
    %p118 = por %p116, %p117
    %p119 = scmp.ne.s32.totalorder %s111, %s113
    %p120 = scmp.eq.s32.totalorder %s19, 1
    %p121 = por %p119, %p120
    %p122 = scmp.ne.s32.totalorder %s113, %s114
    %p123 = scmp.eq.s32.totalorder %s19, 0
    %p124 = por %p122, %p123
    %p125 = scmp.ne.s32.totalorder %s113, %s114
    %p126 = scmp.eq.s32.totalorder %s20, 1
    %p127 = por %p125, %p126
    %p129 = scmp.ne.s32.totalorder %s114, %s128
    %p130 = scmp.eq.s32.totalorder %s20, 0
    %p131 = por %p129, %p130
    %s133 = sadd.s32 %s132, 1
    %p136 = scmp.eq.s32.totalorder %s14, 1
    %p137 = scmp.ne.s32.totalorder %s132, %s134
    %p138 = scmp.eq.s32.totalorder %s14, 0
    %p139 = por %p137, %p138
    %p140 = scmp.ne.s32.totalorder %s132, %s134
    %p141 = scmp.eq.s32.totalorder %s19, 1
    %p142 = por %p140, %p141
    %p143 = scmp.ne.s32.totalorder %s134, %s135
    %p144 = scmp.eq.s32.totalorder %s19, 0
    %p145 = por %p143, %p144
    %p146 = scmp.ne.s32.totalorder %s134, %s135
    %p147 = scmp.eq.s32.totalorder %s20, 1
    %p148 = por %p146, %p147
    %p150 = scmp.ne.s32.totalorder %s135, %s149
    %p151 = scmp.eq.s32.totalorder %s20, 0
    %p152 = por %p150, %p151
    %s154 = sadd.s32 %s153, 1
    %p157 = scmp.eq.s32.totalorder %s14, 1
    %p158 = scmp.ne.s32.totalorder %s153, %s155
    %p159 = scmp.eq.s32.totalorder %s14, 0
    %p160 = por %p158, %p159
    %p161 = scmp.ne.s32.totalorder %s153, %s155
    %p162 = scmp.eq.s32.totalorder %s19, 1
    %p163 = por %p161, %p162
    %p164 = scmp.ne.s32.totalorder %s155, %s156
    %p165 = scmp.eq.s32.totalorder %s19, 0
    %p166 = por %p164, %p165
    %p167 = scmp.ne.s32.totalorder %s155, %s156
    %p168 = scmp.eq.s32.totalorder %s20, 1
    %p169 = por %p167, %p168
    %p171 = scmp.ne.s32.totalorder %s156, %s170
    %p172 = scmp.eq.s32.totalorder %s20, 0
    %p173 = por %p171, %p172
    %s174 = ssub.s32 %s21, %s33
    %s175 = ssub.s32 %s22, %s29
    %s176 = sor.u32 %s174, %s175
    %p177 = scmp.eq.s32.totalorder %s176, 0
    %s179 = sadd.s32 %s178, 1
    %s180 = scalar_select %p177, %s178, %s179
    %p183 = pneg %p177
    %p184 = scmp.eq.s32.totalorder %s14, 1
    %p185 = por %p183, %p184
    %p186 = scmp.ne.s32.totalorder %s178, %s181
    %p187 = scmp.eq.s32.totalorder %s14, 0
    %p188 = por %p186, %p187
    %p189 = scmp.ne.s32.totalorder %s178, %s181
    %p190 = scmp.eq.s32.totalorder %s19, 1
    %p191 = por %p189, %p190
    %p192 = scmp.ne.s32.totalorder %s181, %s182
    %p193 = scmp.eq.s32.totalorder %s19, 0
    %p194 = por %p192, %p193
    %p195 = scmp.ne.s32.totalorder %s181, %s182
    %p196 = scmp.eq.s32.totalorder %s20, 1
    %p197 = por %p195, %p196
    %p199 = scmp.ne.s32.totalorder %s182, %s198
    %p200 = scmp.eq.s32.totalorder %s20, 0
    %p201 = por %p199, %p200
    %s202 = ssub.s32 %s21, %s33
    %p203 = scmp.eq.s32.totalorder %s202, 0
    %s205 = sadd.s32 %s204, 1
    %s206 = scalar_select %p203, %s204, %s205
    %p209 = pneg %p203
    %p210 = scmp.eq.s32.totalorder %s14, 1
    %p211 = por %p209, %p210
    %p212 = scmp.ne.s32.totalorder %s204, %s207
    %p213 = scmp.eq.s32.totalorder %s14, 0
    %p214 = por %p212, %p213
    %p215 = scmp.ne.s32.totalorder %s204, %s207
    %p216 = scmp.eq.s32.totalorder %s19, 1
    %p217 = por %p215, %p216
    %p218 = scmp.ne.s32.totalorder %s207, %s208
    %p219 = scmp.eq.s32.totalorder %s19, 0
    %p220 = por %p218, %p219
    %p221 = scmp.ne.s32.totalorder %s207, %s208
    %p222 = scmp.eq.s32.totalorder %s20, 1
    %p223 = por %p221, %p222
    %p225 = scmp.ne.s32.totalorder %s208, %s224
    %p226 = scmp.eq.s32.totalorder %s20, 0
    %p227 = por %p225, %p226
    %p228 = scmp.le.s32.totalorder 1, %s14
    %p229 = scmp.lt.s32.totalorder %s14, 3
    %p230 = pnand %p228, %p229
    %p231 = pneg %p230
    // Predicated region
    $region9: #{training_model_forward.1} parent=5 // pred_check
      _
    $region10: #{training_model_forward.1} parent=5 // pred_check_branch
      %233 = sbr.rel (%p230) target = $region12
    $region11: #{training_model_forward.1} parent=5 // pred_region
      %s234 = ssub.s32 %s14, 1
      // Predicated region
      $region13: #{training_model_forward.1} parent=11 // pred_check
        %p235 = pneg %p103
      $region14: #{training_model_forward.1} parent=11 // pred_check_branch
        %237 = sbr.rel (%p235) target = $region16
      $region15: #{training_model_forward.1} parent=11 // pred_region
        _
      $region16: #{training_model_forward.1} parent=11 // pred_fallthru
        _
      // Predicated region
      $region17: #{training_model_forward.1} parent=11 // pred_check
        %p238 = pneg %p124
      $region18: #{training_model_forward.1} parent=11 // pred_check_branch
        %240 = sbr.rel (%p238) target = $region20
      $region19: #{training_model_forward.1} parent=11 // pred_region
        _
      $region20: #{training_model_forward.1} parent=11 // pred_fallthru
        _
      // Predicated region
      $region21: #{training_model_forward.1} parent=11 // pred_check
        %p241 = pneg %p145
      $region22: #{training_model_forward.1} parent=11 // pred_check_branch
        %243 = sbr.rel (%p241) target = $region24
      $region23: #{training_model_forward.1} parent=11 // pred_region
        _
      $region24: #{training_model_forward.1} parent=11 // pred_fallthru
        _
      // Predicated region
      $region25: #{training_model_forward.1} parent=11 // pred_check
        %p244 = pneg %p166
      $region26: #{training_model_forward.1} parent=11 // pred_check_branch
        %246 = sbr.rel (%p244) target = $region28
      $region27: #{training_model_forward.1} parent=11 // pred_region
        _
      $region28: #{training_model_forward.1} parent=11 // pred_fallthru
        _
    $region12: #{training_model_forward.1} parent=5 // pred_fallthru
      _
    %p247 = scmp.lt.s32.totalorder %s14, 2
    // Predicated region
    $region29: #{training_model_forward.1} parent=5 // pred_check
      %p248 = pneg %p247
    $region30: #{training_model_forward.1} parent=5 // pred_check_branch
      %250 = sbr.rel (%p248) target = $region32
    $region31: #{training_model_forward.1} parent=5 // pred_region
      // Predicated region
      $region33: #{training_model_forward.1} parent=31 // pred_check
        %p251 = pneg %p48
      $region34: #{training_model_forward.1} parent=31 // pred_check_branch
        %253 = sbr.rel (%p251) target = $region36
      $region35: #{training_model_forward.1} parent=31 // pred_region
        %s254 = smul.u32 2, %s22
        %p255 = scmp.lt.s32.totalorder %s21, 1
        %s256 = scalar_select %p255, %s21, 1
        %p257 = scmp.lt.s32.totalorder %s254, 1
        %s258 = scalar_select %p257, %s254, 1
        %s259 = smul.addr %s256, 2
        %s260 = sadd.s32 %s258, %s259
        %s261 = smul.addr %s260, 4
        %s262 = scalar_lea.vmem %s0, %s261
        %s263 = smul.u32 2, %s22
      $region36: #{training_model_forward.1} parent=31 // pred_fallthru
        _
      // Predicated region
      $region37: #{training_model_forward.1} parent=31 // pred_check
        %p264 = pneg %p76
      $region38: #{training_model_forward.1} parent=31 // pred_check_branch
        %266 = sbr.rel (%p264) target = $region40
      $region39: #{training_model_forward.1} parent=31 // pred_region
        %s267 = smul.u32 2, %s22
        %p268 = scmp.lt.s32.totalorder %s21, 1
        %s269 = scalar_select %p268, %s21, 1
        %p270 = scmp.lt.s32.totalorder %s267, 1
        %s271 = scalar_select %p270, %s267, 1
        %s272 = smul.addr %s269, 2
        %s273 = sadd.s32 %s271, %s272
        %s274 = scalar_lea.vmem %s1, %s273
        %s275 = smul.u32 2, %s22
      $region40: #{training_model_forward.1} parent=31 // pred_fallthru
        _
    $region32: #{training_model_forward.1} parent=5 // pred_fallthru
      _
    %p276 = scmp.le.s32.totalorder 1, %s14
    %p277 = scmp.lt.s32.totalorder %s14, 3
    %p278 = pnand %p276, %p277
    %p279 = pneg %p278
    // Predicated region
    $region41: #{training_model_forward.1} parent=5 // pred_check
      _
    $region42: #{training_model_forward.1} parent=5 // pred_check_branch
      %281 = sbr.rel (%p278) target = $region44
    $region43: #{training_model_forward.1} parent=5 // pred_region
      %s282 = ssub.s32 %s14, 1
      %s283 = smul.u32 2, %s24
      %p284 = scmp.lt.s32.totalorder %s23, 1
      %s285 = scalar_select %p284, %s23, 1
      %p286 = scmp.lt.s32.totalorder %s283, 1
      %s287 = scalar_select %p286, %s283, 1
      %s288 = smul.addr %s285, 2
      %s289 = sadd.s32 %s287, %s288
      %s290 = smul.addr %s289, 4
      %s291 = scalar_lea.vmem %s0, %s290
      %p292 = pneg %p54
      %p293 = pneg %p51
      %s294 = smul.u32 2, %s24
      %p295 = scmp.lt.s32.totalorder %s23, 1
      %s296 = scalar_select %p295, %s23, 1
      %p297 = scmp.lt.s32.totalorder %s294, 1
      %s298 = scalar_select %p297, %s294, 1
      %s299 = smul.addr %s296, 2
      %s300 = sadd.s32 %s298, %s299
      %s301 = scalar_lea.vmem %s1, %s300
      %p302 = pneg %p82
      %p303 = pneg %p79
      %p304 = pneg %p103
      %p305 = pneg %p100
      %p306 = pneg %p124
      %p307 = pneg %p121
      %p308 = pneg %p145
      %p309 = pneg %p142
      %p310 = pneg %p166
      %p311 = pneg %p163
      %p312 = pneg %p194
      %p313 = pneg %p191
      %s314 = smul.u32 2, %s24
      %p315 = scmp.lt.s32.totalorder %s23, 1
      %s316 = scalar_select %p315, %s23, 1
      %p317 = scmp.lt.s32.totalorder %s314, 1
      %s318 = scalar_select %p317, %s314, 1
      %s319 = smul.addr %s316, 2
      %s320 = sadd.s32 %s318, %s319
      %s321 = scalar_lea.vmem %s6, %s320
      %p322 = pneg %p220
      %p323 = pneg %p217
      %p324 = scmp.lt.s32.totalorder %s23, 1
      %s325 = scalar_select %p324, %s23, 1
      %s326 = smul.addr %s325, 8
      %s327 = scalar_lea.vmem %s7, %s326
      %s328 = smul.u32 2, %s24
      %p329 = scmp.lt.s32.totalorder %s23, 1
      %s330 = scalar_select %p329, %s23, 1
      %p331 = scmp.lt.s32.totalorder %s328, 1
      %s332 = scalar_select %p331, %s328, 1
      %s333 = smul.addr %s330, 2
      %s334 = sadd.s32 %s332, %s333
      %s335 = smul.addr %s334, 4
      %s336 = scalar_lea.vmem %s0, %s335
      %s337 = smul.u32 2, %s24
      %s338 = smul.u32 2, %s24
      %p339 = scmp.lt.s32.totalorder %s23, 1
      %s340 = scalar_select %p339, %s23, 1
      %p341 = scmp.lt.s32.totalorder %s338, 1
      %s342 = scalar_select %p341, %s338, 1
      %s343 = smul.addr %s340, 2
      %s344 = sadd.s32 %s342, %s343
      %s345 = scalar_lea.vmem %s1, %s344
      %s346 = smul.u32 2, %s24
      %s347 = smul.u32 2, %s24
      %p348 = scmp.lt.s32.totalorder %s23, 1
      %s349 = scalar_select %p348, %s23, 1
      %p350 = scmp.lt.s32.totalorder %s347, 1
      %s351 = scalar_select %p350, %s347, 1
      %s352 = smul.addr %s349, 2
      %s353 = sadd.s32 %s351, %s352
      %s354 = scalar_lea.vmem %s6, %s353
      %s355 = smul.u32 2, %s24
      %p356 = scmp.lt.s32.totalorder %s23, 1
      %s357 = scalar_select %p356, %s23, 1
      %s358 = smul.addr %s357, 8
      %s359 = scalar_lea.vmem %s7, %s358
      %p360 = scmp.eq.s32.totalorder %s24, 0
      // Predicated region
      $region45: #{training_model_forward.1} parent=43 // pred_check
        %p361 = pneg %p360
      $region46: #{training_model_forward.1} parent=43 // pred_check_branch
        %363 = sbr.rel (%p361) target = $region48
      $region47: #{training_model_forward.1} parent=43 // pred_region
        %vm364 = vcmask 62464
        %365 = vst.msk [vmem:[#allocation2] sm:$0x3f] %vm364, 0.0
      $region48: #{training_model_forward.1} parent=43 // pred_fallthru
        _
      %v366 = vld [vmem:[%s336] sm:$0xff]
      %v367 = vld [vmem:[%s2] sm:$0x3f]
      %v368 = vld [vmem:[%s3] sm:$0x3f]
      %370 = vset.pattern.permute.xlu0 0
      %371 = vperm.xlu0 %370, %v368
      %v372 = vpop.permute.xlu0 %371
      %v375 = vcombine.high %v366, %v366
      %vm376 = vcmask 31744
      %v378 = vsel %vm376, %v367, 0
      %vm380 = vcmask 1043456
      %v381 = vsel %vm380, %v366, 0
      %v383 = vsel %vm380, %v375, 0
      %385 = vmatprep.subr.mxu0 %v383
      %386 = vmatpush1.msra.mxu0 %v381
      %387 = vmatprep.subr.mxu0 0.0
      %388 = vmatpush1.msra.mxu0 0.0
      %389 = vmatprep.subr.mxu0 0.0
      %390 = vmatpush1.msra.mxu0 0.0
      %391 = vmatprep.subr.mxu0 0.0
      %392 = vmatpush1.msra.mxu0 0.0
      %393 = vmatprep.subr.mxu0 0.0
      %394 = vmatpush1.msra.mxu0 0.0
      %395 = vmatprep.subr.mxu0 0.0
      %396 = vmatpush1.msra.mxu0 0.0
      %397 = vmatprep.subr.mxu0 0.0
      %398 = vmatpush1.msra.mxu0 0.0
      %399 = vmatprep.subr.mxu0 0.0
      %400 = vmatpush1.msra.mxu0 0.0
      %401 = vmatprep.subr.mxu0 0.0
      %402 = vmatpush1.msra.mxu0 0.0
      %403 = vmatprep.subr.mxu0 0.0
      %404 = vmatpush1.msra.mxu0 0.0
      %405 = vmatprep.subr.mxu0 0.0
      %406 = vmatpush1.msra.mxu0 0.0
      %407 = vmatprep.subr.mxu0 0.0
      %408 = vmatpush1.msra.mxu0 0.0
      %409 = vmatprep.subr.mxu0 0.0
      %410 = vmatpush1.msra.mxu0 0.0
      %411 = vmatprep.subr.mxu0 0.0
      %412 = vmatpush1.msra.mxu0 0.0
      %413 = vmatprep.subr.mxu0 0.0
      %414 = vmatpush1.msra.mxu0 0.0
      %415 = vmatprep.subr.mxu0 0.0
      %416 = vmatpush1.msra.mxu0 0.0
      %417 = vmatprep.subr.mxu0 0.0
      %418 = vmatpush1.msra.mxu0 0.0
      %419 = vmatprep.subr.mxu0 0.0
      %420 = vmatpush1.msra.mxu0 0.0
      %421 = vmatprep.subr.mxu0 0.0
      %422 = vmatpush1.msra.mxu0 0.0
      %423 = vmatprep.subr.mxu0 0.0
      %424 = vmatpush1.msra.mxu0 0.0
      %425 = vmatprep.subr.mxu0 0.0
      %426 = vmatpush1.msra.mxu0 0.0
      %427 = vmatprep.subr.mxu0 0.0
      %428 = vmatpush1.msra.mxu0 0.0
      %429 = vmatprep.subr.mxu0 0.0
      %430 = vmatpush1.msra.mxu0 0.0
      %431 = vmatprep.subr.mxu0 0.0
      %432 = vmatpush1.msra.mxu0 0.0
      %433 = vmatprep.subr.mxu0 0.0
      %434 = vmatpush1.msra.mxu0 0.0
      %435 = vmatprep.subr.mxu0 0.0
      %436 = vmatpush1.msra.mxu0 0.0
      %437 = vmatprep.subr.mxu0 0.0
      %438 = vmatpush1.msra.mxu0 0.0
      %439 = vmatprep.subr.mxu0 0.0
      %440 = vmatpush1.msra.mxu0 0.0
      %441 = vmatprep.subr.mxu0 0.0
      %442 = vmatpush1.msra.mxu0 0.0
      %443 = vmatprep.subr.mxu0 0.0
      %444 = vmatpush1.msra.mxu0 0.0
      %445 = vmatprep.subr.mxu0 0.0
      %446 = vmatpush1.msra.mxu0 0.0
      %447 = vmatprep.subr.mxu0 0.0
      %448 = vmatpush1.msra.mxu0 0.0
      %449 = vmatprep.mubr.f32.mxu0 0.0
      %450 = vmatmul.mubr.f32.gmra.mrb[0].mxu0 %v378
      %v451 = vpop.f32.mrb[0].mxu0
      %v452 = vadd.f32 %v372, %v451
      %v453 = vpop.f32.mrb[0].mxu0
      %v454 = vadd.f32 %v372, %v453
      %455 = vdwg.mxu0
      %vm456 = vcmask 1045504
      %v457 = vsel %vm456, %v452, -inf
      %v458 = vrot.slane %v457, 4
      %v459 = vmax.f32 %v457, %v458
      %v460 = vrot.slane %v459, 2
      %v461 = vmax.f32 %v459, %v460
      %v462 = vrot.slane %v461, 1
      %v463 = vmax.f32 %v461, %v462
      %v464 = vsel %vm456, %v454, -inf
      %v465 = vrot.slane %v464, 4
      %v466 = vmax.f32 %v464, %v465
      %v467 = vrot.slane %v466, 2
      %v468 = vmax.f32 %v466, %v467
      %v469 = vrot.slane %v468, 1
      %v470 = vmax.f32 %v468, %v469
      %v471 = vsub.f32 %v452, %v463
      %v472 = vsub.f32 %v454, %v470
      %v473 = vmul.f32 %v471, 1.442695
      %v474 = vpow.pop %v473
      %v475 = vmul.f32 %v472, 1.442695
      %v476 = vpow.pop %v475
      %v477 = vsel %vm456, %v474, 0.0
      %v478 = vrot.slane %v477, 4
      %v479 = vadd.f32 %v477, %v478
      %v480 = vrot.slane %v479, 2
      %v481 = vadd.f32 %v479, %v480
      %v482 = vrot.slane %v481, 1
      %v483 = vadd.f32 %v481, %v482
      %v484 = vsel %vm456, %v476, 0.0
      %v485 = vrot.slane %v484, 4
      %v486 = vadd.f32 %v484, %v485
      %v487 = vrot.slane %v486, 2
      %v488 = vadd.f32 %v486, %v487
      %v489 = vrot.slane %v488, 1
      %v490 = vadd.f32 %v488, %v489
      %v491 = vrcp.pop %v483
      %v492 = vrcp.pop %v490
      %v493 = vmul.f32 %v474, %v491
      %v494 = vmul.f32 %v476, %v492
      %v495 = vlog2.pop %v483
      %v496 = vmul.f32 %v495, 0.6931472
      %v497 = vlog2.pop %v490
      %v498 = vmul.f32 %v497, 0.6931472
      %v499 = vsub.f32 %v471, %v496
      %v500 = vsub.f32 %v472, %v498
      %v501 = vmax.f32 %v499, -16.118095
      %v502 = vmax.f32 %v500, -16.118095
      %v503 = vmin.f32 %v501, -1.0000001e-07
      %v504 = vmin.f32 %v502, -1.0000001e-07
      %v505 = vlaneseq
      %v506 = vshrl.u32 %v505, 7
      %v507 = vld [vmem:[%s4] sm:$0x3f]
      %vm508 = vcmp.gt.f32.partialorder %v507, 0.0
      %v509 = vsel %vm508, 1, 0
      %510 = vset.pattern.permute.xlu0 0
      %511 = vperm.xlu0 %510, %v509
      %v512 = vpop.permute.xlu0 %511
      %vm513 = vcmp.eq.s32.totalorder %v512, 1
      %v514 = vsel %vm513, %v452, -inf
      %v515 = vsel %vm513, %v454, -inf
      %v516 = vsel %vm456, %v514, -inf
      %v517 = vrot.slane %v516, 4
      %v518 = vmax.f32 %v516, %v517
      %v519 = vrot.slane %v518, 2
      %v520 = vmax.f32 %v518, %v519
      %v521 = vrot.slane %v520, 1
      %v522 = vmax.f32 %v520, %v521
      %v523 = vsel %vm456, %v515, -inf
      %v524 = vrot.slane %v523, 4
      %v525 = vmax.f32 %v523, %v524
      %v526 = vrot.slane %v525, 2
      %v527 = vmax.f32 %v525, %v526
      %v528 = vrot.slane %v527, 1
      %v529 = vmax.f32 %v527, %v528
      %vm530 = vcmp.eq.f32.partialorder %v514, %v522
      %vm531 = vcmp.eq.f32.partialorder %v515, %v529
      %v532 = vcvt.s32.f32 %v506
      %v533 = vsel %vm530, %v532, 6.0
      %v534 = vsel %vm531, %v532, 6.0
      %v535 = vsel %vm456, %v533, inf
      %v536 = vrot.slane %v535, 4
      %v537 = vmin.f32 %v535, %v536
      %v538 = vrot.slane %v537, 2
      %v539 = vmin.f32 %v537, %v538
      %v540 = vrot.slane %v539, 1
      %v541 = vmin.f32 %v539, %v540
      %v542 = vsel %vm456, %v534, inf
      %v543 = vrot.slane %v542, 4
      %v544 = vmin.f32 %v542, %v543
      %v545 = vrot.slane %v544, 2
      %v546 = vmin.f32 %v544, %v545
      %v547 = vrot.slane %v546, 1
      %v548 = vmin.f32 %v546, %v547
      %v549 = vcvt.f32.s32.to.zero.pseudo %v541
      %v550 = vcvt.f32.s32.to.zero.pseudo %v548
      %v551 = vcombine.low %v549, %v550
      %v553 = vunpack.c.l.s4 1966171168
      %v554 = vunpack.c.0.s8 %v553
      %v555 = vlaneseq
      %v556 = vshrl.u32 %v555, 7
      %v557 = vsub.s32 %v554, %v556
      %v558 = vrot.slane %v551, %v557
      %v560 = vunpack.c.l.s4 1966171168
      %v561 = vunpack.c.0.s8 %v560
      %v562 = vlaneseq
      %v563 = vshrl.u32 %v562, 7
      %v564 = vsub.s32 %v561, %v563
      %v565 = vrot.slane %v558, %v564
      %v566 = vlaneseq
      %vm567 = vcmp.ge.s32.totalorder %v566, 0
      %vm568 = vcmp.lt.s32.totalorder %v566, 256
      %vm569 = vmand %vm567, %vm568
      %570 = vst.msk [vmem:[%s354] sm:$0x3] %vm569, %v565
      %v571 = vld [vmem:[%s345] sm:$0x3]
      %vm572 = vcmp.ne.s32.totalorder %v571, 255
      %v573 = vsel %vm572, 1, 0
      %v574 = vcvt.s32.f32 %v573
      %v575 = vsel %vm572, %v571, 0
      %v576 = vlaneseq
      %v577 = vshrl.u32 %v576, 7
      %v578 = vsub.s32 0, %v577
      %v579 = vrot.slane %v575, %v578
      %v580 = vlaneseq
      %v581 = vshrl.u32 %v580, 7
      %v582 = vsub.s32 1, %v581
      %v583 = vrot.slane %v575, %v582
      %vm584 = vcmp.eq.s32.totalorder %v506, %v579
      %vm585 = vcmp.eq.s32.totalorder %v506, %v583
      %v586 = vsel %vm584, 1, 0
      %v587 = vsel %vm585, 1, 0
      %v588 = vcvt.s32.f32 %v586
      %v589 = vcvt.s32.f32 %v587
      %vm590 = vcmp.eq.s32.totalorder %v506, %v549
      %vm591 = vcmp.eq.s32.totalorder %v506, %v550
      %v592 = vsel %vm590, 1, 0
      %v593 = vsel %vm591, 1, 0
      %v594 = vcvt.s32.f32 %v592
      %v595 = vcvt.s32.f32 %v593
      %v596 = vld [vmem:[%s5] sm:$0x3f]
      %vm597 = vcmask 48128
      %v599 = vsel %vm597, %v596, 0
      %v602 = vsel %vm456, %v588, 0
      %v605 = vsel %vm456, %v589, 0
      %607 = vmatprep.subr.mxu0 %v605
      %608 = vmatpush1.msra.mxu0 %v602
      %609 = vmatprep.subr.mxu0 0.0
      %610 = vmatpush1.msra.mxu0 0.0
      %611 = vmatprep.subr.mxu0 0.0
      %612 = vmatpush1.msra.mxu0 0.0
      %613 = vmatprep.subr.mxu0 0.0
      %614 = vmatpush1.msra.mxu0 0.0
      %615 = vmatprep.subr.mxu0 0.0
      %616 = vmatpush1.msra.mxu0 0.0
      %617 = vmatprep.subr.mxu0 0.0
      %618 = vmatpush1.msra.mxu0 0.0
      %619 = vmatprep.subr.mxu0 0.0
      %620 = vmatpush1.msra.mxu0 0.0
      %621 = vmatprep.subr.mxu0 0.0
      %622 = vmatpush1.msra.mxu0 0.0
      %623 = vmatprep.subr.mxu0 0.0
      %624 = vmatpush1.msra.mxu0 0.0
      %625 = vmatprep.subr.mxu0 0.0
      %626 = vmatpush1.msra.mxu0 0.0
      %627 = vmatprep.subr.mxu0 0.0
      %628 = vmatpush1.msra.mxu0 0.0
      %629 = vmatprep.subr.mxu0 0.0
      %630 = vmatpush1.msra.mxu0 0.0
      %631 = vmatprep.subr.mxu0 0.0
      %632 = vmatpush1.msra.mxu0 0.0
      %633 = vmatprep.subr.mxu0 0.0
      %634 = vmatpush1.msra.mxu0 0.0
      %635 = vmatprep.subr.mxu0 0.0
      %636 = vmatpush1.msra.mxu0 0.0
      %637 = vmatprep.subr.mxu0 0.0
      %638 = vmatpush1.msra.mxu0 0.0
      %639 = vmatprep.subr.mxu0 0.0
      %640 = vmatpush1.msra.mxu0 0.0
      %641 = vmatprep.subr.mxu0 0.0
      %642 = vmatpush1.msra.mxu0 0.0
      %643 = vmatprep.subr.mxu0 0.0
      %644 = vmatpush1.msra.mxu0 0.0
      %645 = vmatprep.subr.mxu0 0.0
      %646 = vmatpush1.msra.mxu0 0.0
      %647 = vmatprep.subr.mxu0 0.0
      %648 = vmatpush1.msra.mxu0 0.0
      %649 = vmatprep.subr.mxu0 0.0
      %650 = vmatpush1.msra.mxu0 0.0
      %651 = vmatprep.subr.mxu0 0.0
      %652 = vmatpush1.msra.mxu0 0.0
      %653 = vmatprep.subr.mxu0 0.0
      %654 = vmatpush1.msra.mxu0 0.0
      %655 = vmatprep.subr.mxu0 0.0
      %656 = vmatpush1.msra.mxu0 0.0
      %657 = vmatprep.subr.mxu0 0.0
      %658 = vmatpush1.msra.mxu0 0.0
      %659 = vmatprep.subr.mxu0 0.0
      %660 = vmatpush1.msra.mxu0 0.0
      %661 = vmatprep.subr.mxu0 0.0
      %662 = vmatpush1.msra.mxu0 0.0
      %663 = vmatprep.subr.mxu0 0.0
      %664 = vmatpush1.msra.mxu0 0.0
      %665 = vmatprep.subr.mxu0 0.0
      %666 = vmatpush1.msra.mxu0 0.0
      %667 = vmatprep.subr.mxu0 0.0
      %668 = vmatpush1.msra.mxu0 0.0
      %669 = vmatprep.subr.mxu0 0.0
      %670 = vmatpush1.msra.mxu0 0.0
      %671 = vmatprep.mubr.f32.mxu0 0.0
      %672 = vmatmul.mubr.f32.gmra.mrb[0].mxu0 %v599
      %v673 = vpop.f32.mrb[0].mxu0
      %v674 = vadd.f32 0.0, %v673
      %v675 = vpop.f32.mrb[0].mxu0
      %v676 = vadd.f32 0.0, %v675
      %677 = vdwg.mxu0
      %v679 = vsel %vm456, %v594, 0
      %v682 = vsel %vm456, %v595, 0
      %684 = vmatprep.subr.mxu0 %v682
      %685 = vmatpush1.msra.mxu0 %v679
      %686 = vmatprep.subr.mxu0 0.0
      %687 = vmatpush1.msra.mxu0 0.0
      %688 = vmatprep.subr.mxu0 0.0
      %689 = vmatpush1.msra.mxu0 0.0
      %690 = vmatprep.subr.mxu0 0.0
      %691 = vmatpush1.msra.mxu0 0.0
      %692 = vmatprep.subr.mxu0 0.0
      %693 = vmatpush1.msra.mxu0 0.0
      %694 = vmatprep.subr.mxu0 0.0
      %695 = vmatpush1.msra.mxu0 0.0
      %696 = vmatprep.subr.mxu0 0.0
      %697 = vmatpush1.msra.mxu0 0.0
      %698 = vmatprep.subr.mxu0 0.0
      %699 = vmatpush1.msra.mxu0 0.0
      %700 = vmatprep.subr.mxu0 0.0
      %701 = vmatpush1.msra.mxu0 0.0
      %702 = vmatprep.subr.mxu0 0.0
      %703 = vmatpush1.msra.mxu0 0.0
      %704 = vmatprep.subr.mxu0 0.0
      %705 = vmatpush1.msra.mxu0 0.0
      %706 = vmatprep.subr.mxu0 0.0
      %707 = vmatpush1.msra.mxu0 0.0
      %708 = vmatprep.subr.mxu0 0.0
      %709 = vmatpush1.msra.mxu0 0.0
      %710 = vmatprep.subr.mxu0 0.0
      %711 = vmatpush1.msra.mxu0 0.0
      %712 = vmatprep.subr.mxu0 0.0
      %713 = vmatpush1.msra.mxu0 0.0
      %714 = vmatprep.subr.mxu0 0.0
      %715 = vmatpush1.msra.mxu0 0.0
      %716 = vmatprep.subr.mxu0 0.0
      %717 = vmatpush1.msra.mxu0 0.0
      %718 = vmatprep.subr.mxu0 0.0
      %719 = vmatpush1.msra.mxu0 0.0
      %720 = vmatprep.subr.mxu0 0.0
      %721 = vmatpush1.msra.mxu0 0.0
      %722 = vmatprep.subr.mxu0 0.0
      %723 = vmatpush1.msra.mxu0 0.0
      %724 = vmatprep.subr.mxu0 0.0
      %725 = vmatpush1.msra.mxu0 0.0
      %726 = vmatprep.subr.mxu0 0.0
      %727 = vmatpush1.msra.mxu0 0.0
      %728 = vmatprep.subr.mxu0 0.0
      %729 = vmatpush1.msra.mxu0 0.0
      %730 = vmatprep.subr.mxu0 0.0
      %731 = vmatpush1.msra.mxu0 0.0
      %732 = vmatprep.subr.mxu0 0.0
      %733 = vmatpush1.msra.mxu0 0.0
      %734 = vmatprep.subr.mxu0 0.0
      %735 = vmatpush1.msra.mxu0 0.0
      %736 = vmatprep.subr.mxu0 0.0
      %737 = vmatpush1.msra.mxu0 0.0
      %738 = vmatprep.subr.mxu0 0.0
      %739 = vmatpush1.msra.mxu0 0.0
      %740 = vmatprep.subr.mxu0 0.0
      %741 = vmatpush1.msra.mxu0 0.0
      %742 = vmatprep.subr.mxu0 0.0
      %743 = vmatpush1.msra.mxu0 0.0
      %744 = vmatprep.subr.mxu0 0.0
      %745 = vmatpush1.msra.mxu0 0.0
      %746 = vmatprep.subr.mxu0 0.0
      %747 = vmatpush1.msra.mxu0 0.0
      %748 = vmatprep.mubr.f32.mxu0 0.0
      %749 = vmatmul.mubr.f32.gmra.mrb[0].mxu0 %v599
      %v750 = vpop.f32.mrb[0].mxu0
      %v751 = vadd.f32 0.0, %v750
      %v752 = vpop.f32.mrb[0].mxu0
      %v753 = vadd.f32 0.0, %v752
      %754 = vdwg.mxu0
      %v756 = vlaneseq
      %v757 = vshrl.u32 %v756, 7
      %v758 = vsub.s32 0, %v757
      %v759 = vrot.slane %v574, %v758
      %v760 = vlaneseq
      %v761 = vshrl.u32 %v760, 7
      %v762 = vsub.s32 1, %v761
      %v763 = vrot.slane %v574, %v762
      %v766 = vmul.f32 %v759, %v674
      %v767 = vmul.f32 %v763, %v676
      %v768 = vmul.f32 %v766, %v493
      %v769 = vmul.f32 %v767, %v494
      %v770 = vsel %vm456, %v768, 0.0
      %v771 = vsel %vm456, %v769, 0.0
      %v772 = vadd.f32 %v770, %v771
      %773 = vadd.xlane.f32.xlu0 %v772
      %v774 = vpop.xlane.xlu0 %773
      %v775 = vmul.f32 %v759, %v493
      %v776 = vmul.f32 %v763, %v494
      %v777 = vsel %vm456, %v775, 0.0
      %v778 = vsel %vm456, %v776, 0.0
      %v779 = vadd.f32 %v777, %v778
      %780 = vadd.xlane.f32.xlu0 %v779
      %v781 = vpop.xlane.xlu0 %780
      %v782 = vsel %vm456, %v766, 0.0
      %v783 = vsel %vm456, %v767, 0.0
      %v784 = vadd.f32 %v782, %v783
      %785 = vadd.xlane.f32.xlu0 %v784
      %v786 = vpop.xlane.xlu0 %785
      %v787 = vmul.f32 %v766, %v751
      %v788 = vmul.f32 %v767, %v753
      %v789 = vsel %vm456, %v787, 0.0
      %v790 = vsel %vm456, %v788, 0.0
      %v791 = vadd.f32 %v789, %v790
      %792 = vadd.xlane.f32.xlu0 %v791
      %v793 = vpop.xlane.xlu0 %792
      %v794 = vmul.f32 %v759, %v751
      %v795 = vmul.f32 %v763, %v753
      %v796 = vsel %vm456, %v794, 0.0
      %v797 = vsel %vm456, %v795, 0.0
      %v798 = vadd.f32 %v796, %v797
      %799 = vadd.xlane.f32.xlu0 %v798
      %v800 = vpop.xlane.xlu0 %799
      %v801 = vsub.f32 0.0, %v503
      %v802 = vsub.f32 0.0, %v504
      %v803 = vmul.f32 %v766, %v801
      %v804 = vmul.f32 %v767, %v802
      %v805 = vsel %vm456, %v803, 0.0
      %v806 = vsel %vm456, %v804, 0.0
      %v807 = vadd.f32 %v805, %v806
      %808 = vadd.xlane.f32.xlu0 %v807
      %v809 = vpop.xlane.xlu0 %808
      %v810 = vrot.slane %v809, 4
      %v811 = vadd.f32 %v809, %v810
      %v812 = vrot.slane %v811, 2
      %v813 = vadd.f32 %v811, %v812
      %v814 = vrot.slane %v813, 1
      %v815 = vadd.f32 %v813, %v814
      %s816 = vtos %v815
      %vm817 = vcmask 1040384
      %v818 = vsel %vm817, %v759, 0.0
      %v819 = vsel %vm817, %v763, 0.0
      %v820 = vadd.f32 %v818, %v819
      %821 = vadd.xlane.f32.xlu0 %v820
      %v822 = vpop.xlane.xlu0 %821
      %v823 = vrot.slane %v822, 4
      %v824 = vadd.f32 %v822, %v823
      %v825 = vrot.slane %v824, 2
      %v826 = vadd.f32 %v824, %v825
      %v827 = vrot.slane %v826, 1
      %v828 = vadd.f32 %v826, %v827
      %s829 = vtos %v828
      %v830 = vld [vmem:[#allocation2] sm:$0x3f]
      %v831 = vadd.f32 %v830, %v774
      %vm832 = vcmask 5120
      %833 = vst.msk [vmem:[#allocation2] sm:$0x3f] %vm832, %v831
      %v834 = vld [vmem:[#allocation2] sm:$0x3f]
      %v835 = vadd.f32 %v834, %v781
      %vm836 = vcmask 13320
      %837 = vst.msk [vmem:[#allocation2] sm:$0x3f] %vm836, %v835
      %v838 = vld [vmem:[#allocation2] sm:$0x3f]
      %v839 = vadd.f32 %v838, %v786
      %vm840 = vcmask 21520
      %841 = vst.msk [vmem:[#allocation2] sm:$0x3f] %vm840, %v839
      %v842 = vld [vmem:[#allocation2] sm:$0x3f]
      %v843 = vadd.f32 %v842, %v793
      %vm844 = vcmask 29720
      %845 = vst.msk [vmem:[#allocation2] sm:$0x3f] %vm844, %v843
      %v846 = vld [vmem:[#allocation2] sm:$0x3f]
      %v847 = vadd.f32 %v846, %v800
      %vm848 = vcmask 37920
      %849 = vst.msk [vmem:[#allocation2] sm:$0x3f] %vm848, %v847
      %v850 = vld [vmem:[#allocation2] sm:$0x3f]
      %v851 = vstv %s816
      %v852 = vadd.f32 %v850, %v851
      %vm853 = vcmask 46120
      %854 = vst.msk [vmem:[#allocation2] sm:$0x3f] %vm853, %v852
      %v855 = vld [vmem:[#allocation2] sm:$0x3f]
      %v856 = vstv %s829
      %v857 = vadd.f32 %v855, %v856
      %vm858 = vcmask 54320
      %859 = vst.msk [vmem:[#allocation2] sm:$0x3f] %vm858, %v857
      // Predicated region
      $region49: #{training_model_forward.1} parent=43 // pred_check
        %p860 = pneg %p360
      $region50: #{training_model_forward.1} parent=43 // pred_check_branch
        %862 = sbr.rel (%p860) target = $region52
      $region51: #{training_model_forward.1} parent=43 // pred_region
        %v863 = vld [vmem:[#allocation2] sm:$0x3f]
        %vm864 = vcmask 62464
        %865 = vst.msk [vmem:[%s359] sm:$0x3f] %vm864, %v863
      $region52: #{training_model_forward.1} parent=43 // pred_fallthru
        _
      %s866 = smul.u32 2, %s24
      %p867 = scmp.lt.s32.totalorder %s23, 1
      %s868 = scalar_select %p867, %s23, 1
      %p869 = scmp.lt.s32.totalorder %s866, 1
      %s870 = scalar_select %p869, %s866, 1
      %s871 = smul.addr %s868, 2
      %s872 = sadd.s32 %s870, %s871
      %s873 = scalar_lea.vmem %s6, %s872
      %p874 = scmp.lt.s32.totalorder %s23, 1
      %s875 = scalar_select %p874, %s23, 1
      %s876 = smul.addr %s875, 8
      %s877 = scalar_lea.vmem %s7, %s876
      // Predicated region
      $region53: #{training_model_forward.1} parent=43 // pred_check
        %p878 = pneg %p191
      $region54: #{training_model_forward.1} parent=43 // pred_check_branch
        %880 = sbr.rel (%p878) target = $region56
      $region55: #{training_model_forward.1} parent=43 // pred_region
        %s881 = smul.u32 2, %s24
      $region56: #{training_model_forward.1} parent=43 // pred_fallthru
        _
      // Predicated region
      $region57: #{training_model_forward.1} parent=43 // pred_check
        %p882 = pneg %p217
      $region58: #{training_model_forward.1} parent=43 // pred_check_branch
        %884 = sbr.rel (%p882) target = $region60
      $region59: #{training_model_forward.1} parent=43 // pred_region
        _
      $region60: #{training_model_forward.1} parent=43 // pred_fallthru
        _
    $region44: #{training_model_forward.1} parent=5 // pred_fallthru
      _
    %p885 = scmp.le.s32.totalorder 2, %s14
    // Predicated region
    $region61: #{training_model_forward.1} parent=5 // pred_check
      %p886 = pneg %p885
    $region62: #{training_model_forward.1} parent=5 // pred_check_branch
      %888 = sbr.rel (%p886) target = $region64
    $region63: #{training_model_forward.1} parent=5 // pred_region
      %s889 = ssub.s32 %s14, 2
      // Predicated region
      $region65: #{training_model_forward.1} parent=63 // pred_check
        %p890 = pneg %p197
      $region66: #{training_model_forward.1} parent=63 // pred_check_branch
        %892 = sbr.rel (%p890) target = $region68
      $region67: #{training_model_forward.1} parent=63 // pred_region
        %s893 = smul.u32 2, %s26
        %p894 = scmp.lt.s32.totalorder %s25, 1
        %s895 = scalar_select %p894, %s25, 1
        %p896 = scmp.lt.s32.totalorder %s893, 1
        %s897 = scalar_select %p896, %s893, 1
        %s898 = smul.addr %s895, 2
        %s899 = sadd.s32 %s897, %s898
        %s900 = scalar_lea.vmem %s6, %s899
      $region68: #{training_model_forward.1} parent=63 // pred_fallthru
        _
      // Predicated region
      $region69: #{training_model_forward.1} parent=63 // pred_check
        %p901 = pneg %p223
      $region70: #{training_model_forward.1} parent=63 // pred_check_branch
        %903 = sbr.rel (%p901) target = $region72
      $region71: #{training_model_forward.1} parent=63 // pred_region
        %p904 = scmp.lt.s32.totalorder %s25, 1
        %s905 = scalar_select %p904, %s25, 1
        %s906 = smul.addr %s905, 8
        %s907 = scalar_lea.vmem %s7, %s906
      $region72: #{training_model_forward.1} parent=63 // pred_fallthru
        _
    $region64: #{training_model_forward.1} parent=5 // pred_fallthru
      _
  $region6: #{training_model_forward.1} parent=0 // loop_footer
    %s18 = sadd.s32 1, %s14
  $region7: #{training_model_forward.1} parent=0 // loop_footer_branch
    %13 = sbr.rel target = $region3
  $region8: #{training_model_forward.1} parent=0 // loop_exit
    _

</llo_original>
